<compile_context>
chip_gen: v5e
topology: v5e:2x2
jax: 0.10.0
libtpu: 0.0.40
codegen_flags: <defaults>
</compile_context>

<pallas_src>
import jax
import jax.numpy as jnp
from jax.experimental import pallas as pl
from jax.experimental.pallas import tpu as pltpu


_SQRT_2_OVER_PI = float((2.0 / jnp.pi) ** 0.5)
_C3 = 0.044715 * _SQRT_2_OVER_PI            # folded constant: sqrt(2/pi)*0.044715
_LANE_WIDTHS = (1024, 512, 256, 128)         # lane-dense candidate widths


def _gelu_kernel(x_ref, o_ref):
    x = x_ref[...]
    if x.dtype != jnp.float32:
        x = x.astype(jnp.float32)            # f32 math (required on v5e; EUP tanh)
    # Horner form, folded constants: 5 vmul + 2 vadd per element, tanh on EUP.
    inner = x * (jnp.float32(_SQRT_2_OVER_PI) + jnp.float32(_C3) * (x * x))
    hx = jnp.float32(0.5) * x
    y = hx + hx * jnp.tanh(inner)
    o_ref[...] = y.astype(o_ref.dtype)


def _vmem_capacity_bytes():
    try:
        return int(pltpu.get_tpu_info().vmem_capacity_bytes)
    except Exception:
        return 64 * 1024 * 1024              # conservative: v7x per-TC VMEM


def _jnp_gelu(x):
    # Single fused pass for awkward total sizes (cheaper than pad+kernel+slice).
    xf = x.astype(jnp.float32)
    y = 0.5 * xf * (1.0 + jnp.tanh(_SQRT_2_OVER_PI * (xf + 0.044715 * xf * xf * xf)))
    return y.astype(x.dtype)


def gelu(x, *, target_block_bytes=None, donate_input=False):
    """Tanh-approx GELU: 0.5*x*(1 + tanh(sqrt(2/pi)*(x + 0.044715*x^3))).

    Matches the reference PyTorch module (i.e. torch GELU(approximate='tanh')),
    NOT the exact-erf default of torch.nn.GELU().
    """
    orig_shape = x.shape
    dtype = x.dtype
    n = x.size
    if n == 0:
        return x

    # Pick a lane-dense width (multiple of 128) dividing the flat size.
    cols = None
    for cand in _LANE_WIDTHS:
        if n % cand == 0:
            cols = cand
            break
    if cols is None:
        # Awkward total size: one fused jnp pass instead of 3 HBM passes.
        return _jnp_gelu(x)

    rows = n // cols
    x2 = x.reshape(rows, cols)

    itemsize = jnp.dtype(dtype).itemsize
    vmem_cap = _vmem_capacity_bytes()
    if target_block_bytes is None:
        # ~8 MiB tiles on 128-MiB-VMEM parts (v5e/v6e), ~4 MiB on 64-MiB (v7x).
        target_block_bytes = (8 * 1024 * 1024 if vmem_cap >= 128 * 1024 * 1024
                              else 4 * 1024 * 1024)

    block_rows = max(8, target_block_bytes // (cols * itemsize))
    block_rows = (block_rows // 8) * 8       # keep the (8,128) layout constraint
    if block_rows >= rows:
        block_rows = rows                    # single full-extent block: always legal
    grid = pl.cdiv(rows, block_rows)         # ragged last block handled by masking

    # Working set: in + out, double-buffered, plus Mosaic scratch headroom.
    block_bytes = block_rows * cols * itemsize
    vmem_limit = min(vmem_cap,
                     max(4 * block_bytes + 2 * 1024 * 1024, 16 * 1024 * 1024))

    cost = pl.CostEstimate(
        flops=7 * n,
        transcendentals=n,
        bytes_accessed=2 * n * itemsize,
    )

    out2 = pl.pallas_call(
        _gelu_kernel,
        out_shape=jax.ShapeDtypeStruct((rows, cols), dtype),
        grid_spec=pltpu.PrefetchScalarGridSpec(
            num_scalar_prefetch=0,
            grid=(grid,),
            in_specs=[pl.BlockSpec((block_rows, cols), lambda i: (i, 0))],
            out_specs=pl.BlockSpec((block_rows, cols), lambda i: (i, 0)),
        ),
        compiler_params=pltpu.CompilerParams(
            dimension_semantics=("parallel",),
            vmem_limit_bytes=int(vmem_limit),
            allow_input_fusion=[True],       # let XLA fuse a producer into this call
        ),
        cost_estimate=cost,
        input_output_aliases=({0: 0} if donate_input else {}),
    )(x2)

    return out2.reshape(orig_shape)


def gelu_ref(x):
    xf = x.astype(jnp.float32)
    return (0.5 * xf * (1.0 + jnp.tanh(_SQRT_2_OVER_PI
                                       * (xf + 0.044715 * xf ** 3)))).astype(x.dtype)


if __name__ == "__main__":
    key = jax.random.PRNGKey(0)

    # 1) Small GPT-2-style activation, f32 (single full-extent block).
    x1 = jax.random.normal(key, (2, 8, 32), dtype=jnp.float32)
    y1 = jax.block_until_ready(gelu(x1))
    assert y1.shape == x1.shape and y1.dtype == x1.dtype
    assert jnp.allclose(y1, gelu_ref(x1), atol=1e-5, rtol=1e-5)

    # 2) bf16 I/O (f32 math in-kernel, cast back to bf16).
    x2 = jax.random.normal(jax.random.PRNGKey(1), (2, 8, 32), dtype=jnp.bfloat16)
    y2 = jax.block_until_ready(gelu(x2))
    assert y2.shape == x2.shape and y2.dtype == jnp.bfloat16
    assert jnp.allclose(y2.astype(jnp.float32), gelu_ref(x2).astype(jnp.float32),
                        atol=2e-2, rtol=2e-2)

    # 3) Multi-block grid with a ragged, boundary-masked last tile:
    #    25 rows x 1024 lanes, block_rows=8 -> grid=4, last block 1 row.
    x3 = jax.random.normal(jax.random.PRNGKey(2), (2, 100, 128), dtype=jnp.float32)
    y3 = jax.block_until_ready(gelu(x3, target_block_bytes=32 * 1024))
    assert jnp.allclose(y3, gelu_ref(x3), atol=1e-5, rtol=1e-5)

    # 4) Awkward total size -> single fused jnp fallback pass (no pad/slice copies).
    x4 = jax.random.normal(jax.random.PRNGKey(3), (3, 7), dtype=jnp.float32)
    y4 = jax.block_until_ready(gelu(x4))
    assert jnp.allclose(y4, gelu_ref(x4), atol=1e-5, rtol=1e-5)

    print("KERNEL_OK")
</pallas_src>

<mosaic_0001>
module attributes {stable_mosaic.version = 11 : i64} {
  func.func @_gelu_kernel(%arg0: i32, %arg1: memref<1x512xf32, #tpu.memory_space<vmem>>, %arg2: memref<1x512xf32, #tpu.memory_space<vmem>>) attributes {dimension_semantics = [#tpu.dimension_semantics<parallel>], iteration_bounds = array<i64: 1>, scalar_prefetch = 0 : i64, scratch_operands = 0 : i64, tpu.core_type = #tpu.core_type<tc>, window_params = [{transform_indices = @transform_0, window_bounds = array<i64: 1, 512>}, {transform_indices = @transform_1, window_bounds = array<i64: 1, 512>}]} {
    %c0 = arith.constant 0 : index
    %c0_0 = arith.constant 0 : index
    %0 = vector.load %arg1[%c0, %c0_0] : memref<1x512xf32, #tpu.memory_space<vmem>>, vector<1x512xf32>
    %1 = arith.mulf %0, %0 : vector<1x512xf32>
    %cst = arith.constant 0.0356774069 : f32
    %2 = vector.broadcast %cst : f32 to vector<1x512xf32>
    %3 = arith.mulf %2, %1 : vector<1x512xf32>
    %cst_1 = arith.constant 0.797884583 : f32
    %4 = vector.broadcast %cst_1 : f32 to vector<1x512xf32>
    %5 = arith.addf %4, %3 : vector<1x512xf32>
    %6 = arith.mulf %0, %5 : vector<1x512xf32>
    %cst_2 = arith.constant 5.000000e-01 : f32
    %7 = vector.broadcast %cst_2 : f32 to vector<1x512xf32>
    %8 = arith.mulf %7, %0 : vector<1x512xf32>
    %9 = math.tanh %6 : vector<1x512xf32>
    %10 = arith.mulf %8, %9 : vector<1x512xf32>
    %11 = arith.addf %8, %10 : vector<1x512xf32>
    %c0_3 = arith.constant 0 : index
    %c0_4 = arith.constant 0 : index
    %12 = vector.load %arg2[%c0_3, %c0_4] : memref<1x512xf32, #tpu.memory_space<vmem>>, vector<1x512xf32>
    tpu.vector_store %arg2[%c0_3, %c0_4], %11 {strides = array<i32>} : memref<1x512xf32, #tpu.memory_space<vmem>>, vector<1x512xf32>,
    return
  }
  func.func @transform_0(%arg0: i32) -> (i32, i32) {
    %c0_i32 = arith.constant 0 : i32
    %c0_i32_0 = arith.constant 0 : i32
    return %arg0, %c0_i32 : i32, i32
  }
  func.func @transform_1(%arg0: i32) -> (i32, i32) {
    %c0_i32 = arith.constant 0 : i32
    %c0_i32_0 = arith.constant 0 : i32
    return %arg0, %c0_i32 : i32, i32
  }
}

</mosaic_0001>

<llo_original>
// kernel: tpu_custom_call.1
$region0: #{tpu_custom_call.1}
  #allocation0 [shape = 'u32[]', space=smem, size = 0x4, offset = 0x4, fixed_abs, tag = 'smem constant byte address 0x4 - core index']
  #allocation1 [shape = 'u32[72,128]{1,0:T(1,128)}', space=vmem, size = 0x9000, scoped, tag = 'internal scratch']
  %s0 = inlined_call_operand.hbm [shape: f32[1,512], index: 0, kind: input, shape index: {}]
  %s1 = inlined_call_operand.hbm [shape: f32[1,512], index: 1, kind: output, shape index: {}]
  %s2 = sld [smem:[#allocation0]]
  $region18: #{tpu_custom_call.1} parent=0
    _
  %s4 = ssub.s32 1, %s2
  %s5 = scalar_select 0, %s4, %s2
  $region1: #{tpu_custom_call.1} parent=0
    #allocation2 [shape = 'u8[2048]{0}', space=vmem, size = 0x800, scoped, tag = 'input window, operand 0, single buffered']
    #allocation3 [shape = 's32[1]{0}', space=sflag, size = 0x4, scoped, tag = 'scoped memory for tpu_custom_call.1']
    #allocation4 [shape = 's32[1]{0}', space=sflag, size = 0x4, scoped, tag = 'scoped memory for tpu_custom_call.1']
    #allocation5 [shape = 'u8[2048]{0}', space=vmem, size = 0x800, scoped, tag = 'output window, operand 0, single buffered']
    %6 = vsyncpa [#allocation3], 0
    %7 = vsyncpa [#allocation4], 0
    // Predicated region
    $region2: #{tpu_custom_call.1} parent=1 // pred_check
      _
    $region3: #{tpu_custom_call.1} parent=1 // pred_check_branch
      %9 = sbr.rel (0) target = $region5
    $region4: #{tpu_custom_call.1} parent=1 // pred_region
      %11 = vsyncadd [#allocation3], 0
      %s13 = sshll.u32 %s0, 4
      %s14 = int_to_ptr.hbm [resolvable:$true] %s13
      %s15 = sshll.u32 [#allocation2], 4
      %s16 = int_to_ptr.vmem [resolvable:$true] %s15
      %18 = dma.hbm_to_vmem [thread:$0]  %s14, 64, %s16, [#allocation3]
    $region5: #{tpu_custom_call.1} parent=1 // pred_fallthru
      _
    // Predicated region
    $region6: #{tpu_custom_call.1} parent=1 // pred_check
      _
    $region7: #{tpu_custom_call.1} parent=1 // pred_check_branch
      %20 = sbr.rel (0) target = $region9
    $region8: #{tpu_custom_call.1} parent=1 // pred_region
      %22 = dma.done [#allocation3], 64
    $region9: #{tpu_custom_call.1} parent=1 // pred_fallthru
      _
    %v23 = vld [vmem:[#allocation2] sm:$0xf]
    %v24 = vmul.f32 %v23, %v23
    %v25 = vmul.f32 %v24, 0.035677407
    %v26 = vadd.f32 %v25, 0.7978846
    %v27 = vmul.f32 %v23, %v26
    %v28 = vmul.f32 %v23, 0.5
    %v29 = vtanh.pop %v27
    %v30 = vmul.f32 %v28, %v29
    %v31 = vadd.f32 %v28, %v30
    %v32 = vlaneseq
    %vm33 = vcmp.ge.s32.totalorder %v32, 0
    %vm34 = vcmp.lt.s32.totalorder %v32, 512
    %vm35 = vmand %vm33, %vm34
    %36 = vst.msk [vmem:[#allocation5] sm:$0xf] %vm35, %v31
    // Predicated region
    $region10: #{tpu_custom_call.1} parent=1 // pred_check
      _
    $region11: #{tpu_custom_call.1} parent=1 // pred_check_branch
      %38 = sbr.rel (0) target = $region13
    $region12: #{tpu_custom_call.1} parent=1 // pred_region
      %40 = vsyncadd [#allocation4], 0
      %s42 = sshll.u32 [#allocation5], 4
      %s43 = int_to_ptr.vmem [resolvable:$true] %s42
      %s44 = sshll.u32 %s1, 4
      %s45 = int_to_ptr.hbm [resolvable:$true] %s44
      %47 = dma.vmem_to_hbm [thread:$0]  %s43, 64, %s45, [#allocation4]
    $region13: #{tpu_custom_call.1} parent=1 // pred_fallthru
      _
    // Predicated region
    $region14: #{tpu_custom_call.1} parent=1 // pred_check
      _
    $region15: #{tpu_custom_call.1} parent=1 // pred_check_branch
      %49 = sbr.rel (0) target = $region17
    $region16: #{tpu_custom_call.1} parent=1 // pred_region
      %51 = dma.done [#allocation4], 64
    $region17: #{tpu_custom_call.1} parent=1 // pred_fallthru
      _
    %52 = vsyncpa [#allocation3], 1
    %53 = vsyncpa [#allocation4], 1

</llo_original>
